<compile_context>
chip_gen: v7x
topology: tpu7x:2x2x1
jax: 0.10.0
libtpu: 0.0.40
codegen_flags: <defaults>
</compile_context>

<pallas_src>
import functools
import math

import jax
import jax.numpy as jnp
from jax.experimental import pallas as pl
from jax.experimental.pallas import tpu as pltpu


def _round_up(x: int, m: int) -> int:
    return (x + m - 1) // m * m


def _rnn_kernel(x_ref, wih_ref, whh_ref, bias_ref, hseq_ref, xproj_ref,
                *, seq_len: int, bs_p: int):
    """x_ref:    (seq*bs_p, in_p)   time-major, batch padded to sublane mult.
       wih_ref:  (in_p, hid_p)      = W_ih^T (padded)
       whh_ref:  (hid_p, hid_p)     = W_hh^T (padded)
       bias_ref: (1, hid_p)         = (b_ih + b_hh)^T (padded)
       hseq_ref: (seq*bs_p, hid_p)  output, row block t*bs_p.. holds h_t
       xproj_ref: VMEM scratch, same shape as hseq_ref
    """
    # Phase 1: parallel input projection for every timestep at once
    # (one well-shaped MXU matmul; also folds both biases).
    xproj_ref[...] = (
        jnp.dot(x_ref[...], wih_ref[...], preferred_element_type=jnp.float32)
        + bias_ref[...]
    )

    # Phase 2: the unavoidable serial recurrence — per step only h @ W_hh^T.
    whh = whh_ref[...]
    h = jnp.zeros((bs_p, hseq_ref.shape[1]), jnp.float32)
    for t in range(seq_len):          # seq_len is small & static -> unrolled
        rows = pl.ds(t * bs_p, bs_p)  # static start, lane-dense rows
        pre = xproj_ref[rows, :] + jnp.dot(
            h, whh, preferred_element_type=jnp.float32)
        h = jnp.tanh(pre)             # EUP slot
        hseq_ref[rows, :] = h


def naive_rnn_forward(inputs, w_ih, b_ih, w_hh, b_hh):
    """inputs: (batch, seq, input_size) float32.

    Returns (hidden_seq, h_last) with hidden_seq of shape (seq*batch, hidden)
    and h_last of shape (hidden, batch), matching the PyTorch module.
    """
    bs, seq_len, input_size = inputs.shape
    hidden_size = w_ih.shape[0]

    bs_p = _round_up(bs, 8)            # sublane multiple
    in_p = _round_up(input_size, 128)  # lane multiple
    hid_p = _round_up(hidden_size, 128)

    # Wrapper-side layout plumbing (zero-cost relative to the recurrence):
    # time-major + zero padding, pre-transposed weights, fused lane-dense bias.
    x_tm = jnp.transpose(inputs, (1, 0, 2)).astype(jnp.float32)
    x_pad = jnp.pad(x_tm, ((0, 0), (0, bs_p - bs), (0, in_p - input_size)))
    x_flat = x_pad.reshape(seq_len * bs_p, in_p)

    w_ih_t = jnp.pad(w_ih.T.astype(jnp.float32),
                     ((0, in_p - input_size), (0, hid_p - hidden_size)))
    w_hh_t = jnp.pad(w_hh.T.astype(jnp.float32),
                     ((0, hid_p - hidden_size), (0, hid_p - hidden_size)))
    bias = jnp.pad((b_ih + b_hh).T.astype(jnp.float32),
                   ((0, 0), (0, hid_p - hidden_size)))       # (1, hid_p)

    kernel = functools.partial(_rnn_kernel, seq_len=seq_len, bs_p=bs_p)

    hseq_pad = pl.pallas_call(
        kernel,
        out_shape=jax.ShapeDtypeStruct((seq_len * bs_p, hid_p), jnp.float32),
        grid_spec=pltpu.PrefetchScalarGridSpec(
            num_scalar_prefetch=0,
            grid=(1,),  # whole (short) sequence resident in one grid step
            in_specs=[
                pl.BlockSpec((seq_len * bs_p, in_p), lambda i: (0, 0)),
                pl.BlockSpec((in_p, hid_p), lambda i: (0, 0)),
                pl.BlockSpec((hid_p, hid_p), lambda i: (0, 0)),
                pl.BlockSpec((1, hid_p), lambda i: (0, 0)),
            ],
            out_specs=pl.BlockSpec((seq_len * bs_p, hid_p), lambda i: (0, 0)),
            scratch_shapes=[pltpu.VMEM((seq_len * bs_p, hid_p), jnp.float32)],
        ),
        compiler_params=pltpu.CompilerParams(
            dimension_semantics=("arbitrary",)),  # sequential recurrence carry
    )(x_flat, w_ih_t, w_hh_t, bias)

    # Strip padding and rebuild the PyTorch output layout.
    hseq_tm = hseq_pad.reshape(seq_len, bs_p, hid_p)[:, :bs, :hidden_size]
    hidden_seq = hseq_tm.reshape(seq_len * bs, hidden_size)
    h_last = hseq_tm[-1].T                                   # (hidden, batch)
    return hidden_seq, h_last


def _reference(inputs, w_ih, b_ih, w_hh, b_hh):
    bs, seq_len, _ = inputs.shape
    hidden = w_ih.shape[0]
    h_t = jnp.zeros((hidden, bs), jnp.float32)
    outs = []
    for t in range(seq_len):
        x_t = inputs[:, t, :].T
        h_t = jnp.tanh(w_ih @ x_t + b_ih + w_hh @ h_t + b_hh)
        outs.append(h_t.T)
    return jnp.concatenate(outs, axis=0), h_t


if __name__ == "__main__":
    batch, seq_len, input_size, hidden_size = 2, 8, 16, 32

    key = jax.random.PRNGKey(0)
    k_x, k1, k2, k3, k4 = jax.random.split(key, 5)
    stdv = 1.0 / math.sqrt(hidden_size)

    x = jax.random.normal(k_x, (batch, seq_len, input_size), jnp.float32)
    w_ih = jax.random.uniform(k1, (hidden_size, input_size), jnp.float32, -stdv, stdv)
    b_ih = jax.random.uniform(k2, (hidden_size, 1), jnp.float32, -stdv, stdv)
    w_hh = jax.random.uniform(k3, (hidden_size, hidden_size), jnp.float32, -stdv, stdv)
    b_hh = jax.random.uniform(k4, (hidden_size, 1), jnp.float32, -stdv, stdv)

    hidden_seq, h_last = naive_rnn_forward(x, w_ih, b_ih, w_hh, b_hh)
    jax.block_until_ready((hidden_seq, h_last))

    ref_seq, ref_last = _reference(x, w_ih, b_ih, w_hh, b_hh)
    assert hidden_seq.shape == (seq_len * batch, hidden_size)
    assert h_last.shape == (hidden_size, batch)
    assert jnp.allclose(hidden_seq, ref_seq, atol=1e-4, rtol=1e-4)
    assert jnp.allclose(h_last, ref_last, atol=1e-4, rtol=1e-4)

    print("KERNEL_OK")
</pallas_src>

<mosaic_0001>
module attributes {stable_mosaic.version = 11 : i64} {
  func.func @_rnn_kernel(%arg0: i32, %arg1: memref<64x128xf32, #tpu.memory_space<vmem>>, %arg2: memref<128x128xf32, #tpu.memory_space<vmem>>, %arg3: memref<128x128xf32, #tpu.memory_space<vmem>>, %arg4: memref<1x128xf32, #tpu.memory_space<vmem>>, %arg5: memref<64x128xf32, #tpu.memory_space<vmem>>, %arg6: memref<64x128xf32, #tpu.memory_space<vmem>>) attributes {dimension_semantics = [#tpu.dimension_semantics<arbitrary>], iteration_bounds = array<i64: 1>, scalar_prefetch = 0 : i64, scratch_operands = 1 : i64, tpu.core_type = #tpu.core_type<tc>, window_params = [{pipeline_mode = #tpu.pipeline_mode<synchronous>, transform_indices = @transform_0, window_bounds = array<i64: 64, 128>}, {pipeline_mode = #tpu.pipeline_mode<synchronous>, transform_indices = @transform_1, window_bounds = array<i64: 128, 128>}, {pipeline_mode = #tpu.pipeline_mode<synchronous>, transform_indices = @transform_2, window_bounds = array<i64: 128, 128>}, {pipeline_mode = #tpu.pipeline_mode<synchronous>, transform_indices = @transform_3, window_bounds = array<i64: 1, 128>}, {pipeline_mode = #tpu.pipeline_mode<synchronous>, transform_indices = @transform_4, window_bounds = array<i64: 64, 128>}]} {
    %c0 = arith.constant 0 : index
    %c0_0 = arith.constant 0 : index
    %0 = vector.load %arg1[%c0, %c0_0] : memref<64x128xf32, #tpu.memory_space<vmem>>, vector<64x128xf32>
    %c0_1 = arith.constant 0 : index
    %c0_2 = arith.constant 0 : index
    %1 = vector.load %arg2[%c0_1, %c0_2] : memref<128x128xf32, #tpu.memory_space<vmem>>, vector<128x128xf32>
    %cst = arith.constant dense<0.000000e+00> : vector<64x128xf32>
    %2 = tpu.matmul %0, %1, %cst {dimension_numbers = #tpu.dot_dimension_numbers<[1], [0], [0], [1], [0, 0, 1, 1], [], []>} : vector<64x128xf32>, vector<128x128xf32>, vector<64x128xf32> -> vector<64x128xf32>
    %c0_3 = arith.constant 0 : index
    %c0_4 = arith.constant 0 : index
    %3 = vector.load %arg4[%c0_3, %c0_4] : memref<1x128xf32, #tpu.memory_space<vmem>>, vector<1x128xf32>
    %4 = vector.broadcast %3 : vector<1x128xf32> to vector<64x128xf32>
    %5 = arith.addf %2, %4 : vector<64x128xf32>
    %c0_5 = arith.constant 0 : index
    %c0_6 = arith.constant 0 : index
    %6 = vector.load %arg6[%c0_5, %c0_6] : memref<64x128xf32, #tpu.memory_space<vmem>>, vector<64x128xf32>
    tpu.vector_store %arg6[%c0_5, %c0_6], %5 {strides = array<i32>} : memref<64x128xf32, #tpu.memory_space<vmem>>, vector<64x128xf32>,
    %c0_7 = arith.constant 0 : index
    %c0_8 = arith.constant 0 : index
    %7 = vector.load %arg3[%c0_7, %c0_8] : memref<128x128xf32, #tpu.memory_space<vmem>>, vector<128x128xf32>
    %cst_9 = arith.constant 0.000000e+00 : f32
    %8 = vector.broadcast %cst_9 : f32 to vector<8x128xf32>
    %c0_10 = arith.constant 0 : index
    %c0_11 = arith.constant 0 : index
    %9 = vector.load %arg6[%c0_10, %c0_11] : memref<64x128xf32, #tpu.memory_space<vmem>>, vector<8x128xf32>
    %cst_12 = arith.constant dense<0.000000e+00> : vector<8x128xf32>
    %10 = tpu.matmul %8, %7, %cst_12 {dimension_numbers = #tpu.dot_dimension_numbers<[1], [0], [0], [1], [0, 0, 1, 1], [], []>} : vector<8x128xf32>, vector<128x128xf32>, vector<8x128xf32> -> vector<8x128xf32>
    %11 = arith.addf %9, %10 : vector<8x128xf32>
    %12 = math.tanh %11 : vector<8x128xf32>
    %c0_13 = arith.constant 0 : index
    %c0_14 = arith.constant 0 : index
    %13 = vector.load %arg5[%c0_13, %c0_14] : memref<64x128xf32, #tpu.memory_space<vmem>>, vector<8x128xf32>
    tpu.vector_store %arg5[%c0_13, %c0_14], %12 {strides = array<i32>} : memref<64x128xf32, #tpu.memory_space<vmem>>, vector<8x128xf32>,
    %c8 = arith.constant 8 : index
    %c0_15 = arith.constant 0 : index
    %14 = vector.load %arg6[%c8, %c0_15] : memref<64x128xf32, #tpu.memory_space<vmem>>, vector<8x128xf32>
    %cst_16 = arith.constant dense<0.000000e+00> : vector<8x128xf32>
    %15 = tpu.matmul %12, %7, %cst_16 {dimension_numbers = #tpu.dot_dimension_numbers<[1], [0], [0], [1], [0, 0, 1, 1], [], []>} : vector<8x128xf32>, vector<128x128xf32>, vector<8x128xf32> -> vector<8x128xf32>
    %16 = arith.addf %14, %15 : vector<8x128xf32>
    %17 = math.tanh %16 : vector<8x128xf32>
    %c8_17 = arith.constant 8 : index
    %c0_18 = arith.constant 0 : index
    %18 = vector.load %arg5[%c8_17, %c0_18] : memref<64x128xf32, #tpu.memory_space<vmem>>, vector<8x128xf32>
    tpu.vector_store %arg5[%c8_17, %c0_18], %17 {strides = array<i32>} : memref<64x128xf32, #tpu.memory_space<vmem>>, vector<8x128xf32>,
    %c16 = arith.constant 16 : index
    %c0_19 = arith.constant 0 : index
    %19 = vector.load %arg6[%c16, %c0_19] : memref<64x128xf32, #tpu.memory_space<vmem>>, vector<8x128xf32>
    %cst_20 = arith.constant dense<0.000000e+00> : vector<8x128xf32>
    %20 = tpu.matmul %17, %7, %cst_20 {dimension_numbers = #tpu.dot_dimension_numbers<[1], [0], [0], [1], [0, 0, 1, 1], [], []>} : vector<8x128xf32>, vector<128x128xf32>, vector<8x128xf32> -> vector<8x128xf32>
    %21 = arith.addf %19, %20 : vector<8x128xf32>
    %22 = math.tanh %21 : vector<8x128xf32>
    %c16_21 = arith.constant 16 : index
    %c0_22 = arith.constant 0 : index
    %23 = vector.load %arg5[%c16_21, %c0_22] : memref<64x128xf32, #tpu.memory_space<vmem>>, vector<8x128xf32>
    tpu.vector_store %arg5[%c16_21, %c0_22], %22 {strides = array<i32>} : memref<64x128xf32, #tpu.memory_space<vmem>>, vector<8x128xf32>,
    %c24 = arith.constant 24 : index
    %c0_23 = arith.constant 0 : index
    %24 = vector.load %arg6[%c24, %c0_23] : memref<64x128xf32, #tpu.memory_space<vmem>>, vector<8x128xf32>
    %cst_24 = arith.constant dense<0.000000e+00> : vector<8x128xf32>
    %25 = tpu.matmul %22, %7, %cst_24 {dimension_numbers = #tpu.dot_dimension_numbers<[1], [0], [0], [1], [0, 0, 1, 1], [], []>} : vector<8x128xf32>, vector<128x128xf32>, vector<8x128xf32> -> vector<8x128xf32>
    %26 = arith.addf %24, %25 : vector<8x128xf32>
    %27 = math.tanh %26 : vector<8x128xf32>
    %c24_25 = arith.constant 24 : index
    %c0_26 = arith.constant 0 : index
    %28 = vector.load %arg5[%c24_25, %c0_26] : memref<64x128xf32, #tpu.memory_space<vmem>>, vector<8x128xf32>
    tpu.vector_store %arg5[%c24_25, %c0_26], %27 {strides = array<i32>} : memref<64x128xf32, #tpu.memory_space<vmem>>, vector<8x128xf32>,
    %c32 = arith.constant 32 : index
    %c0_27 = arith.constant 0 : index
    %29 = vector.load %arg6[%c32, %c0_27] : memref<64x128xf32, #tpu.memory_space<vmem>>, vector<8x128xf32>
    %cst_28 = arith.constant dense<0.000000e+00> : vector<8x128xf32>
    %30 = tpu.matmul %27, %7, %cst_28 {dimension_numbers = #tpu.dot_dimension_numbers<[1], [0], [0], [1], [0, 0, 1, 1], [], []>} : vector<8x128xf32>, vector<128x128xf32>, vector<8x128xf32> -> vector<8x128xf32>
    %31 = arith.addf %29, %30 : vector<8x128xf32>
    %32 = math.tanh %31 : vector<8x128xf32>
    %c32_29 = arith.constant 32 : index
    %c0_30 = arith.constant 0 : index
    %33 = vector.load %arg5[%c32_29, %c0_30] : memref<64x128xf32, #tpu.memory_space<vmem>>, vector<8x128xf32>
    tpu.vector_store %arg5[%c32_29, %c0_30], %32 {strides = array<i32>} : memref<64x128xf32, #tpu.memory_space<vmem>>, vector<8x128xf32>,
    %c40 = arith.constant 40 : index
    %c0_31 = arith.constant 0 : index
    %34 = vector.load %arg6[%c40, %c0_31] : memref<64x128xf32, #tpu.memory_space<vmem>>, vector<8x128xf32>
    %cst_32 = arith.constant dense<0.000000e+00> : vector<8x128xf32>
    %35 = tpu.matmul %32, %7, %cst_32 {dimension_numbers = #tpu.dot_dimension_numbers<[1], [0], [0], [1], [0, 0, 1, 1], [], []>} : vector<8x128xf32>, vector<128x128xf32>, vector<8x128xf32> -> vector<8x128xf32>
    %36 = arith.addf %34, %35 : vector<8x128xf32>
    %37 = math.tanh %36 : vector<8x128xf32>
    %c40_33 = arith.constant 40 : index
    %c0_34 = arith.constant 0 : index
    %38 = vector.load %arg5[%c40_33, %c0_34] : memref<64x128xf32, #tpu.memory_space<vmem>>, vector<8x128xf32>
    tpu.vector_store %arg5[%c40_33, %c0_34], %37 {strides = array<i32>} : memref<64x128xf32, #tpu.memory_space<vmem>>, vector<8x128xf32>,
    %c48 = arith.constant 48 : index
    %c0_35 = arith.constant 0 : index
    %39 = vector.load %arg6[%c48, %c0_35] : memref<64x128xf32, #tpu.memory_space<vmem>>, vector<8x128xf32>
    %cst_36 = arith.constant dense<0.000000e+00> : vector<8x128xf32>
    %40 = tpu.matmul %37, %7, %cst_36 {dimension_numbers = #tpu.dot_dimension_numbers<[1], [0], [0], [1], [0, 0, 1, 1], [], []>} : vector<8x128xf32>, vector<128x128xf32>, vector<8x128xf32> -> vector<8x128xf32>
    %41 = arith.addf %39, %40 : vector<8x128xf32>
    %42 = math.tanh %41 : vector<8x128xf32>
    %c48_37 = arith.constant 48 : index
    %c0_38 = arith.constant 0 : index
    %43 = vector.load %arg5[%c48_37, %c0_38] : memref<64x128xf32, #tpu.memory_space<vmem>>, vector<8x128xf32>
    tpu.vector_store %arg5[%c48_37, %c0_38], %42 {strides = array<i32>} : memref<64x128xf32, #tpu.memory_space<vmem>>, vector<8x128xf32>,
    %c56 = arith.constant 56 : index
    %c0_39 = arith.constant 0 : index
    %44 = vector.load %arg6[%c56, %c0_39] : memref<64x128xf32, #tpu.memory_space<vmem>>, vector<8x128xf32>
    %cst_40 = arith.constant dense<0.000000e+00> : vector<8x128xf32>
    %45 = tpu.matmul %42, %7, %cst_40 {dimension_numbers = #tpu.dot_dimension_numbers<[1], [0], [0], [1], [0, 0, 1, 1], [], []>} : vector<8x128xf32>, vector<128x128xf32>, vector<8x128xf32> -> vector<8x128xf32>
    %46 = arith.addf %44, %45 : vector<8x128xf32>
    %47 = math.tanh %46 : vector<8x128xf32>
    %c56_41 = arith.constant 56 : index
    %c0_42 = arith.constant 0 : index
    %48 = vector.load %arg5[%c56_41, %c0_42] : memref<64x128xf32, #tpu.memory_space<vmem>>, vector<8x128xf32>
    tpu.vector_store %arg5[%c56_41, %c0_42], %47 {strides = array<i32>} : memref<64x128xf32, #tpu.memory_space<vmem>>, vector<8x128xf32>,
    return
  }
  func.func @transform_0(%arg0: i32) -> (i32, i32) {
    %c0_i32 = arith.constant 0 : i32
    %c0_i32_0 = arith.constant 0 : i32
    %c0_i32_1 = arith.constant 0 : i32
    return %c0_i32, %c0_i32_0 : i32, i32
  }
  func.func @transform_1(%arg0: i32) -> (i32, i32) {
    %c0_i32 = arith.constant 0 : i32
    %c0_i32_0 = arith.constant 0 : i32
    %c0_i32_1 = arith.constant 0 : i32
    return %c0_i32, %c0_i32_0 : i32, i32
  }
  func.func @transform_2(%arg0: i32) -> (i32, i32) {
    %c0_i32 = arith.constant 0 : i32
    %c0_i32_0 = arith.constant 0 : i32
    %c0_i32_1 = arith.constant 0 : i32
    return %c0_i32, %c0_i32_0 : i32, i32
  }
  func.func @transform_3(%arg0: i32) -> (i32, i32) {
    %c0_i32 = arith.constant 0 : i32
    %c0_i32_0 = arith.constant 0 : i32
    %c0_i32_1 = arith.constant 0 : i32
    return %c0_i32, %c0_i32_0 : i32, i32
  }
  func.func @transform_4(%arg0: i32) -> (i32, i32) {
    %c0_i32 = arith.constant 0 : i32
    %c0_i32_0 = arith.constant 0 : i32
    %c0_i32_1 = arith.constant 0 : i32
    return %c0_i32, %c0_i32_0 : i32, i32
  }
}

</mosaic_0001>

<llo_original>
// kernel: tpu_custom_call.1
$region0: #{tpu_custom_call.1}
  #allocation0 [shape = 'u32[]', space=smem, size = 0x4, offset = 0x4, fixed_abs, tag = 'smem constant byte address 0x4 - core index']
  #allocation1 [shape = 'u32[144,128]{1,0:T(1,128)}', space=vmem, size = 0x12000, scoped, tag = 'internal scratch']
  #allocation2 [shape = 'f32[64,128]{1,0:T(8,128)}', space=vmem, size = 0x8000, scoped, tag = 'scratch operand']
  %s0 = inlined_call_operand.hbm [shape: f32[64,128], index: 0, kind: input, shape index: {}]
  %s1 = inlined_call_operand.hbm [shape: f32[128,128], index: 1, kind: input, shape index: {}]
  %s2 = inlined_call_operand.hbm [shape: f32[128,128], index: 2, kind: input, shape index: {}]
  %s3 = inlined_call_operand.vmem [shape: f32[1,128], index: 3, kind: input, shape index: {}]
  %s4 = inlined_call_operand.hbm [shape: f32[64,128], index: 4, kind: output, shape index: {}]
  %s5 = sld [smem:[#allocation0]]
  $region38: #{tpu_custom_call.1} parent=0
    _
  %s7 = ssub.s32 1, %s5
  %s8 = scalar_select 0, %s7, %s5
  $region1: #{tpu_custom_call.1} parent=0
    #allocation3 [shape = 'u8[32768]{0}', space=vmem, size = 0x8000, scoped, tag = 'input window, operand 0, single buffered']
    #allocation4 [shape = 's32[1]{0}', space=sflag, size = 0x4, scoped, tag = 'scoped memory for tpu_custom_call.1']
    #allocation5 [shape = 's32[1]{0}', space=sflag, size = 0x4, scoped, tag = 'scoped memory for tpu_custom_call.1']
    #allocation6 [shape = 'u8[65536]{0}', space=vmem, size = 0x10000, scoped, tag = 'input window, operand 1, single buffered']
    #allocation7 [shape = 's32[1]{0}', space=sflag, size = 0x4, scoped, tag = 'scoped memory for tpu_custom_call.1']
    #allocation8 [shape = 'u8[65536]{0}', space=vmem, size = 0x10000, scoped, tag = 'input window, operand 2, single buffered']
    #allocation9 [shape = 'u8[32768]{0}', space=vmem, size = 0x8000, scoped, tag = 'output window, operand 0, single buffered']
    %9 = vsyncpa [#allocation4], 0
    %10 = vsyncpa [#allocation7], 0
    %11 = vsyncpa [#allocation5], 0
    // Predicated region
    $region2: #{tpu_custom_call.1} parent=1 // pred_check
      _
    $region3: #{tpu_custom_call.1} parent=1 // pred_check_branch
      %13 = sbr.rel (0) target = $region5
    $region4: #{tpu_custom_call.1} parent=1 // pred_region
      %s15 = ssub.s32 1024, 1024
      %16 = vsyncadd [#allocation4], %s15
      %s17 = sshll.u32 [#allocation3], 4
      %s18 = int_to_ptr.vmem [resolvable:$true] %s17
      %23 = dma.hbm_to_vmem [thread:$0]  %s0, 1024, %s18, [#allocation4], 128, 128, 8
    $region5: #{tpu_custom_call.1} parent=1 // pred_fallthru
      _
    // Predicated region
    $region6: #{tpu_custom_call.1} parent=1 // pred_check
      _
    $region7: #{tpu_custom_call.1} parent=1 // pred_check_branch
      %25 = sbr.rel (0) target = $region9
    $region8: #{tpu_custom_call.1} parent=1 // pred_region
      %s27 = ssub.s32 2048, 2048
      %28 = vsyncadd [#allocation7], %s27
      %s29 = sshll.u32 [#allocation6], 4
      %s30 = int_to_ptr.vmem [resolvable:$true] %s29
      %35 = dma.hbm_to_vmem [thread:$0]  %s1, 2048, %s30, [#allocation7], 128, 128, 8
    $region9: #{tpu_custom_call.1} parent=1 // pred_fallthru
      _
    // Predicated region
    $region10: #{tpu_custom_call.1} parent=1 // pred_check
      _
    $region11: #{tpu_custom_call.1} parent=1 // pred_check_branch
      %37 = sbr.rel (0) target = $region13
    $region12: #{tpu_custom_call.1} parent=1 // pred_region
      %s39 = ssub.s32 2048, 2048
      %40 = vsyncadd [#allocation7], %s39
      %s41 = sshll.u32 [#allocation8], 4
      %s42 = int_to_ptr.vmem [resolvable:$true] %s41
      %47 = dma.hbm_to_vmem [thread:$0]  %s2, 2048, %s42, [#allocation7], 128, 128, 8
    $region13: #{tpu_custom_call.1} parent=1 // pred_fallthru
      _
    // Predicated region
    $region14: #{tpu_custom_call.1} parent=1 // pred_check
      _
    $region15: #{tpu_custom_call.1} parent=1 // pred_check_branch
      %49 = sbr.rel (0) target = $region17
    $region16: #{tpu_custom_call.1} parent=1 // pred_region
      _
    $region17: #{tpu_custom_call.1} parent=1 // pred_fallthru
      _
    // Predicated region
    $region18: #{tpu_custom_call.1} parent=1 // pred_check
      _
    $region19: #{tpu_custom_call.1} parent=1 // pred_check_branch
      %51 = sbr.rel (0) target = $region21
    $region20: #{tpu_custom_call.1} parent=1 // pred_region
      %52 = dma.done [#allocation4], 1024
    $region21: #{tpu_custom_call.1} parent=1 // pred_fallthru
      _
    // Predicated region
    $region22: #{tpu_custom_call.1} parent=1 // pred_check
      _
    $region23: #{tpu_custom_call.1} parent=1 // pred_check_branch
      %54 = sbr.rel (0) target = $region25
    $region24: #{tpu_custom_call.1} parent=1 // pred_region
      %55 = dma.done [#allocation7], 2048
    $region25: #{tpu_custom_call.1} parent=1 // pred_fallthru
      _
    // Predicated region
    $region26: #{tpu_custom_call.1} parent=1 // pred_check
      _
    $region27: #{tpu_custom_call.1} parent=1 // pred_check_branch
      %57 = sbr.rel (0) target = $region29
    $region28: #{tpu_custom_call.1} parent=1 // pred_region
      %58 = dma.done [#allocation7], 2048
    $region29: #{tpu_custom_call.1} parent=1 // pred_fallthru
      _
    %v59 = vld [vmem:[#allocation3] sm:$0xff]
    %v60 = vld [vmem:[#allocation3 + $0x8] sm:$0xff]
    %v61 = vld [vmem:[#allocation3 + $0x10] sm:$0xff]
    %v62 = vld [vmem:[#allocation3 + $0x18] sm:$0xff]
    %v63 = vld [vmem:[#allocation3 + $0x20] sm:$0xff]
    %v64 = vld [vmem:[#allocation3 + $0x28] sm:$0xff]
    %v65 = vld [vmem:[#allocation3 + $0x30] sm:$0xff]
    %v66 = vld [vmem:[#allocation3 + $0x38] sm:$0xff]
    %v67 = vld [vmem:[#allocation6] sm:$0xff]
    %v68 = vld [vmem:[#allocation6 + $0x8] sm:$0xff]
    %v69 = vld [vmem:[#allocation6 + $0x10] sm:$0xff]
    %v70 = vld [vmem:[#allocation6 + $0x18] sm:$0xff]
    %v71 = vld [vmem:[#allocation6 + $0x20] sm:$0xff]
    %v72 = vld [vmem:[#allocation6 + $0x28] sm:$0xff]
    %v73 = vld [vmem:[#allocation6 + $0x30] sm:$0xff]
    %v74 = vld [vmem:[#allocation6 + $0x38] sm:$0xff]
    %v75 = vld [vmem:[#allocation6 + $0x40] sm:$0xff]
    %v76 = vld [vmem:[#allocation6 + $0x48] sm:$0xff]
    %v77 = vld [vmem:[#allocation6 + $0x50] sm:$0xff]
    %v78 = vld [vmem:[#allocation6 + $0x58] sm:$0xff]
    %v79 = vld [vmem:[#allocation6 + $0x60] sm:$0xff]
    %v80 = vld [vmem:[#allocation6 + $0x68] sm:$0xff]
    %v81 = vld [vmem:[#allocation6 + $0x70] sm:$0xff]
    %v82 = vld [vmem:[#allocation6 + $0x78] sm:$0xff]
    %v83 = vld [vmem:[%s3] sm:$0x1]
    %v85 = vlaneseq
    %v86 = vshrl.u32 %v85, 7
    %v87 = vsub.s32 0, %v86
    %v88 = vrot.slane %v83, %v87
    %90 = vmatprep.subr.mxu0 0.0
    %91 = vmatpush1.msra.mxu0 %v67
    %92 = vmatprep.subr.mxu0 0.0
    %93 = vmatpush1.msra.mxu0 %v68
    %94 = vmatprep.subr.mxu0 0.0
    %95 = vmatpush1.msra.mxu0 %v69
    %96 = vmatprep.subr.mxu0 0.0
    %97 = vmatpush1.msra.mxu0 %v70
    %98 = vmatprep.subr.mxu0 0.0
    %99 = vmatpush1.msra.mxu0 %v71
    %100 = vmatprep.subr.mxu0 0.0
    %101 = vmatpush1.msra.mxu0 %v72
    %102 = vmatprep.subr.mxu0 0.0
    %103 = vmatpush1.msra.mxu0 %v73
    %104 = vmatprep.subr.mxu0 0.0
    %105 = vmatpush1.msra.mxu0 %v74
    %106 = vmatprep.subr.mxu0 0.0
    %107 = vmatpush1.msra.mxu0 %v75
    %108 = vmatprep.subr.mxu0 0.0
    %109 = vmatpush1.msra.mxu0 %v76
    %110 = vmatprep.subr.mxu0 0.0
    %111 = vmatpush1.msra.mxu0 %v77
    %112 = vmatprep.subr.mxu0 0.0
    %113 = vmatpush1.msra.mxu0 %v78
    %114 = vmatprep.subr.mxu0 0.0
    %115 = vmatpush1.msra.mxu0 %v79
    %116 = vmatprep.subr.mxu0 0.0
    %117 = vmatpush1.msra.mxu0 %v80
    %118 = vmatprep.subr.mxu0 0.0
    %119 = vmatpush1.msra.mxu0 %v81
    %120 = vmatprep.subr.mxu0 0.0
    %121 = vmatpush1.msra.mxu0 %v82
    %122 = vmatprep.subr.mxu0 0.0
    %123 = vmatpush1.msra.mxu0 0.0
    %124 = vmatprep.subr.mxu0 0.0
    %125 = vmatpush1.msra.mxu0 0.0
    %126 = vmatprep.subr.mxu0 0.0
    %127 = vmatpush1.msra.mxu0 0.0
    %128 = vmatprep.subr.mxu0 0.0
    %129 = vmatpush1.msra.mxu0 0.0
    %130 = vmatprep.subr.mxu0 0.0
    %131 = vmatpush1.msra.mxu0 0.0
    %132 = vmatprep.subr.mxu0 0.0
    %133 = vmatpush1.msra.mxu0 0.0
    %134 = vmatprep.subr.mxu0 0.0
    %135 = vmatpush1.msra.mxu0 0.0
    %136 = vmatprep.subr.mxu0 0.0
    %137 = vmatpush1.msra.mxu0 0.0
    %138 = vmatprep.subr.mxu0 0.0
    %139 = vmatpush1.msra.mxu0 0.0
    %140 = vmatprep.subr.mxu0 0.0
    %141 = vmatpush1.msra.mxu0 0.0
    %142 = vmatprep.subr.mxu0 0.0
    %143 = vmatpush1.msra.mxu0 0.0
    %144 = vmatprep.subr.mxu0 0.0
    %145 = vmatpush1.msra.mxu0 0.0
    %146 = vmatprep.subr.mxu0 0.0
    %147 = vmatpush1.msra.mxu0 0.0
    %148 = vmatprep.subr.mxu0 0.0
    %149 = vmatpush1.msra.mxu0 0.0
    %150 = vmatprep.subr.mxu0 0.0
    %151 = vmatpush1.msra.mxu0 0.0
    %152 = vmatprep.subr.mxu0 0.0
    %153 = vmatpush1.msra.mxu0 0.0
    %154 = vmatprep.mubr.f32.mxu0 0.0
    %155 = vmatmul.mubr.f32.gmra.mrb[0].mxu0 %v59
    %v156 = vpop.f32.mrb[0].mxu0
    %v157 = vadd.f32 %v88, %v156
    %v158 = vpop.f32.mrb[0].mxu0
    %159 = vmatprep.mubr.f32.mxu0 0.0
    %160 = vmatmul.mubr.f32.gmra.mrb[0].mxu0 %v60
    %v161 = vpop.f32.mrb[0].mxu0
    %v162 = vadd.f32 %v88, %v161
    %v163 = vpop.f32.mrb[0].mxu0
    %164 = vmatprep.mubr.f32.mxu0 0.0
    %165 = vmatmul.mubr.f32.gmra.mrb[0].mxu0 %v61
    %v166 = vpop.f32.mrb[0].mxu0
    %v167 = vadd.f32 %v88, %v166
    %v168 = vpop.f32.mrb[0].mxu0
    %169 = vmatprep.mubr.f32.mxu0 0.0
    %170 = vmatmul.mubr.f32.gmra.mrb[0].mxu0 %v62
    %v171 = vpop.f32.mrb[0].mxu0
    %v172 = vadd.f32 %v88, %v171
    %v173 = vpop.f32.mrb[0].mxu0
    %174 = vmatprep.mubr.f32.mxu0 0.0
    %175 = vmatmul.mubr.f32.gmra.mrb[0].mxu0 %v63
    %v176 = vpop.f32.mrb[0].mxu0
    %v177 = vadd.f32 %v88, %v176
    %v178 = vpop.f32.mrb[0].mxu0
    %179 = vmatprep.mubr.f32.mxu0 0.0
    %180 = vmatmul.mubr.f32.gmra.mrb[0].mxu0 %v64
    %v181 = vpop.f32.mrb[0].mxu0
    %v182 = vadd.f32 %v88, %v181
    %v183 = vpop.f32.mrb[0].mxu0
    %184 = vmatprep.mubr.f32.mxu0 0.0
    %185 = vmatmul.mubr.f32.gmra.mrb[0].mxu0 %v65
    %v186 = vpop.f32.mrb[0].mxu0
    %v187 = vadd.f32 %v88, %v186
    %v188 = vpop.f32.mrb[0].mxu0
    %189 = vmatprep.mubr.f32.mxu0 0.0
    %190 = vmatmul.mubr.f32.gmra.mrb[0].mxu0 %v66
    %v191 = vpop.f32.mrb[0].mxu0
    %v192 = vadd.f32 %v88, %v191
    %v193 = vpop.f32.mrb[0].mxu0
    %194 = vdwg.mxu0
    %195 = vst [vmem:[#allocation2] sm:$0xff] %v157
    %196 = vst [vmem:[#allocation2 + $0x8] sm:$0xff] %v162
    %197 = vst [vmem:[#allocation2 + $0x10] sm:$0xff] %v167
    %198 = vst [vmem:[#allocation2 + $0x18] sm:$0xff] %v172
    %199 = vst [vmem:[#allocation2 + $0x20] sm:$0xff] %v177
    %200 = vst [vmem:[#allocation2 + $0x28] sm:$0xff] %v182
    %201 = vst [vmem:[#allocation2 + $0x30] sm:$0xff] %v187
    %202 = vst [vmem:[#allocation2 + $0x38] sm:$0xff] %v192
    %v203 = vld [vmem:[#allocation8] sm:$0xff]
    %v204 = vld [vmem:[#allocation8 + $0x8] sm:$0xff]
    %v205 = vld [vmem:[#allocation8 + $0x10] sm:$0xff]
    %v206 = vld [vmem:[#allocation8 + $0x18] sm:$0xff]
    %v207 = vld [vmem:[#allocation8 + $0x20] sm:$0xff]
    %v208 = vld [vmem:[#allocation8 + $0x28] sm:$0xff]
    %v209 = vld [vmem:[#allocation8 + $0x30] sm:$0xff]
    %v210 = vld [vmem:[#allocation8 + $0x38] sm:$0xff]
    %v211 = vld [vmem:[#allocation8 + $0x40] sm:$0xff]
    %v212 = vld [vmem:[#allocation8 + $0x48] sm:$0xff]
    %v213 = vld [vmem:[#allocation8 + $0x50] sm:$0xff]
    %v214 = vld [vmem:[#allocation8 + $0x58] sm:$0xff]
    %v215 = vld [vmem:[#allocation8 + $0x60] sm:$0xff]
    %v216 = vld [vmem:[#allocation8 + $0x68] sm:$0xff]
    %v217 = vld [vmem:[#allocation8 + $0x70] sm:$0xff]
    %v218 = vld [vmem:[#allocation8 + $0x78] sm:$0xff]
    %v219 = vld [vmem:[#allocation2] sm:$0xff]
    %220 = vmatprep.subr.mxu0 0.0
    %221 = vmatpush1.msra.mxu0 %v203
    %222 = vmatprep.subr.mxu0 0.0
    %223 = vmatpush1.msra.mxu0 %v204
    %224 = vmatprep.subr.mxu0 0.0
    %225 = vmatpush1.msra.mxu0 %v205
    %226 = vmatprep.subr.mxu0 0.0
    %227 = vmatpush1.msra.mxu0 %v206
    %228 = vmatprep.subr.mxu0 0.0
    %229 = vmatpush1.msra.mxu0 %v207
    %230 = vmatprep.subr.mxu0 0.0
    %231 = vmatpush1.msra.mxu0 %v208
    %232 = vmatprep.subr.mxu0 0.0
    %233 = vmatpush1.msra.mxu0 %v209
    %234 = vmatprep.subr.mxu0 0.0
    %235 = vmatpush1.msra.mxu0 %v210
    %236 = vmatprep.subr.mxu0 0.0
    %237 = vmatpush1.msra.mxu0 %v211
    %238 = vmatprep.subr.mxu0 0.0
    %239 = vmatpush1.msra.mxu0 %v212
    %240 = vmatprep.subr.mxu0 0.0
    %241 = vmatpush1.msra.mxu0 %v213
    %242 = vmatprep.subr.mxu0 0.0
    %243 = vmatpush1.msra.mxu0 %v214
    %244 = vmatprep.subr.mxu0 0.0
    %245 = vmatpush1.msra.mxu0 %v215
    %246 = vmatprep.subr.mxu0 0.0
    %247 = vmatpush1.msra.mxu0 %v216
    %248 = vmatprep.subr.mxu0 0.0
    %249 = vmatpush1.msra.mxu0 %v217
    %250 = vmatprep.subr.mxu0 0.0
    %251 = vmatpush1.msra.mxu0 %v218
    %252 = vmatprep.subr.mxu0 0.0
    %253 = vmatpush1.msra.mxu0 0.0
    %254 = vmatprep.subr.mxu0 0.0
    %255 = vmatpush1.msra.mxu0 0.0
    %256 = vmatprep.subr.mxu0 0.0
    %257 = vmatpush1.msra.mxu0 0.0
    %258 = vmatprep.subr.mxu0 0.0
    %259 = vmatpush1.msra.mxu0 0.0
    %260 = vmatprep.subr.mxu0 0.0
    %261 = vmatpush1.msra.mxu0 0.0
    %262 = vmatprep.subr.mxu0 0.0
    %263 = vmatpush1.msra.mxu0 0.0
    %264 = vmatprep.subr.mxu0 0.0
    %265 = vmatpush1.msra.mxu0 0.0
    %266 = vmatprep.subr.mxu0 0.0
    %267 = vmatpush1.msra.mxu0 0.0
    %268 = vmatprep.subr.mxu0 0.0
    %269 = vmatpush1.msra.mxu0 0.0
    %270 = vmatprep.subr.mxu0 0.0
    %271 = vmatpush1.msra.mxu0 0.0
    %272 = vmatprep.subr.mxu0 0.0
    %273 = vmatpush1.msra.mxu0 0.0
    %274 = vmatprep.subr.mxu0 0.0
    %275 = vmatpush1.msra.mxu0 0.0
    %276 = vmatprep.subr.mxu0 0.0
    %277 = vmatpush1.msra.mxu0 0.0
    %278 = vmatprep.subr.mxu0 0.0
    %279 = vmatpush1.msra.mxu0 0.0
    %280 = vmatprep.subr.mxu0 0.0
    %281 = vmatpush1.msra.mxu0 0.0
    %282 = vmatprep.subr.mxu0 0.0
    %283 = vmatpush1.msra.mxu0 0.0
    %284 = vmatprep.mubr.f32.mxu0 0.0
    %285 = vmatmul.mubr.f32.gmra.mrb[0].mxu0 0.0
    %v286 = vpop.f32.mrb[0].mxu0
    %v287 = vadd.f32 0.0, %v286
    %v288 = vpop.f32.mrb[0].mxu0
    %289 = vdwg.mxu0
    %v290 = vadd.f32 %v219, %v287
    %v291 = vtanh.pop %v290
    %292 = vst [vmem:[#allocation9] sm:$0xff] %v291
    %v293 = vld [vmem:[#allocation2 + $0x8] sm:$0xff]
    %294 = vmatprep.subr.mxu0 0.0
    %295 = vmatpush1.msra.mxu0 %v203
    %296 = vmatprep.subr.mxu0 0.0
    %297 = vmatpush1.msra.mxu0 %v204
    %298 = vmatprep.subr.mxu0 0.0
    %299 = vmatpush1.msra.mxu0 %v205
    %300 = vmatprep.subr.mxu0 0.0
    %301 = vmatpush1.msra.mxu0 %v206
    %302 = vmatprep.subr.mxu0 0.0
    %303 = vmatpush1.msra.mxu0 %v207
    %304 = vmatprep.subr.mxu0 0.0
    %305 = vmatpush1.msra.mxu0 %v208
    %306 = vmatprep.subr.mxu0 0.0
    %307 = vmatpush1.msra.mxu0 %v209
    %308 = vmatprep.subr.mxu0 0.0
    %309 = vmatpush1.msra.mxu0 %v210
    %310 = vmatprep.subr.mxu0 0.0
    %311 = vmatpush1.msra.mxu0 %v211
    %312 = vmatprep.subr.mxu0 0.0
    %313 = vmatpush1.msra.mxu0 %v212
    %314 = vmatprep.subr.mxu0 0.0
    %315 = vmatpush1.msra.mxu0 %v213
    %316 = vmatprep.subr.mxu0 0.0
    %317 = vmatpush1.msra.mxu0 %v214
    %318 = vmatprep.subr.mxu0 0.0
    %319 = vmatpush1.msra.mxu0 %v215
    %320 = vmatprep.subr.mxu0 0.0
    %321 = vmatpush1.msra.mxu0 %v216
    %322 = vmatprep.subr.mxu0 0.0
    %323 = vmatpush1.msra.mxu0 %v217
    %324 = vmatprep.subr.mxu0 0.0
    %325 = vmatpush1.msra.mxu0 %v218
    %326 = vmatprep.subr.mxu0 0.0
    %327 = vmatpush1.msra.mxu0 0.0
    %328 = vmatprep.subr.mxu0 0.0
    %329 = vmatpush1.msra.mxu0 0.0
    %330 = vmatprep.subr.mxu0 0.0
    %331 = vmatpush1.msra.mxu0 0.0
    %332 = vmatprep.subr.mxu0 0.0
    %333 = vmatpush1.msra.mxu0 0.0
    %334 = vmatprep.subr.mxu0 0.0
    %335 = vmatpush1.msra.mxu0 0.0
    %336 = vmatprep.subr.mxu0 0.0
    %337 = vmatpush1.msra.mxu0 0.0
    %338 = vmatprep.subr.mxu0 0.0
    %339 = vmatpush1.msra.mxu0 0.0
    %340 = vmatprep.subr.mxu0 0.0
    %341 = vmatpush1.msra.mxu0 0.0
    %342 = vmatprep.subr.mxu0 0.0
    %343 = vmatpush1.msra.mxu0 0.0
    %344 = vmatprep.subr.mxu0 0.0
    %345 = vmatpush1.msra.mxu0 0.0
    %346 = vmatprep.subr.mxu0 0.0
    %347 = vmatpush1.msra.mxu0 0.0
    %348 = vmatprep.subr.mxu0 0.0
    %349 = vmatpush1.msra.mxu0 0.0
    %350 = vmatprep.subr.mxu0 0.0
    %351 = vmatpush1.msra.mxu0 0.0
    %352 = vmatprep.subr.mxu0 0.0
    %353 = vmatpush1.msra.mxu0 0.0
    %354 = vmatprep.subr.mxu0 0.0
    %355 = vmatpush1.msra.mxu0 0.0
    %356 = vmatprep.subr.mxu0 0.0
    %357 = vmatpush1.msra.mxu0 0.0
    %358 = vmatprep.mubr.f32.mxu0 0.0
    %359 = vmatmul.mubr.f32.gmra.mrb[0].mxu0 %v291
    %v360 = vpop.f32.mrb[0].mxu0
    %v361 = vadd.f32 0.0, %v360
    %v362 = vpop.f32.mrb[0].mxu0
    %363 = vdwg.mxu0
    %v364 = vadd.f32 %v293, %v361
    %v365 = vtanh.pop %v364
    %366 = vst [vmem:[#allocation9 + $0x8] sm:$0xff] %v365
    %v367 = vld [vmem:[#allocation2 + $0x10] sm:$0xff]
    %368 = vmatprep.subr.mxu0 0.0
    %369 = vmatpush1.msra.mxu0 %v203
    %370 = vmatprep.subr.mxu0 0.0
    %371 = vmatpush1.msra.mxu0 %v204
    %372 = vmatprep.subr.mxu0 0.0
    %373 = vmatpush1.msra.mxu0 %v205
    %374 = vmatprep.subr.mxu0 0.0
    %375 = vmatpush1.msra.mxu0 %v206
    %376 = vmatprep.subr.mxu0 0.0
    %377 = vmatpush1.msra.mxu0 %v207
    %378 = vmatprep.subr.mxu0 0.0
    %379 = vmatpush1.msra.mxu0 %v208
    %380 = vmatprep.subr.mxu0 0.0
    %381 = vmatpush1.msra.mxu0 %v209
    %382 = vmatprep.subr.mxu0 0.0
    %383 = vmatpush1.msra.mxu0 %v210
    %384 = vmatprep.subr.mxu0 0.0
    %385 = vmatpush1.msra.mxu0 %v211
    %386 = vmatprep.subr.mxu0 0.0
    %387 = vmatpush1.msra.mxu0 %v212
    %388 = vmatprep.subr.mxu0 0.0
    %389 = vmatpush1.msra.mxu0 %v213
    %390 = vmatprep.subr.mxu0 0.0
    %391 = vmatpush1.msra.mxu0 %v214
    %392 = vmatprep.subr.mxu0 0.0
    %393 = vmatpush1.msra.mxu0 %v215
    %394 = vmatprep.subr.mxu0 0.0
    %395 = vmatpush1.msra.mxu0 %v216
    %396 = vmatprep.subr.mxu0 0.0
    %397 = vmatpush1.msra.mxu0 %v217
    %398 = vmatprep.subr.mxu0 0.0
    %399 = vmatpush1.msra.mxu0 %v218
    %400 = vmatprep.subr.mxu0 0.0
    %401 = vmatpush1.msra.mxu0 0.0
    %402 = vmatprep.subr.mxu0 0.0
    %403 = vmatpush1.msra.mxu0 0.0
    %404 = vmatprep.subr.mxu0 0.0
    %405 = vmatpush1.msra.mxu0 0.0
    %406 = vmatprep.subr.mxu0 0.0
    %407 = vmatpush1.msra.mxu0 0.0
    %408 = vmatprep.subr.mxu0 0.0
    %409 = vmatpush1.msra.mxu0 0.0
    %410 = vmatprep.subr.mxu0 0.0
    %411 = vmatpush1.msra.mxu0 0.0
    %412 = vmatprep.subr.mxu0 0.0
    %413 = vmatpush1.msra.mxu0 0.0
    %414 = vmatprep.subr.mxu0 0.0
    %415 = vmatpush1.msra.mxu0 0.0
    %416 = vmatprep.subr.mxu0 0.0
    %417 = vmatpush1.msra.mxu0 0.0
    %418 = vmatprep.subr.mxu0 0.0
    %419 = vmatpush1.msra.mxu0 0.0
    %420 = vmatprep.subr.mxu0 0.0
    %421 = vmatpush1.msra.mxu0 0.0
    %422 = vmatprep.subr.mxu0 0.0
    %423 = vmatpush1.msra.mxu0 0.0
    %424 = vmatprep.subr.mxu0 0.0
    %425 = vmatpush1.msra.mxu0 0.0
    %426 = vmatprep.subr.mxu0 0.0
    %427 = vmatpush1.msra.mxu0 0.0
    %428 = vmatprep.subr.mxu0 0.0
    %429 = vmatpush1.msra.mxu0 0.0
    %430 = vmatprep.subr.mxu0 0.0
    %431 = vmatpush1.msra.mxu0 0.0
    %432 = vmatprep.mubr.f32.mxu0 0.0
    %433 = vmatmul.mubr.f32.gmra.mrb[0].mxu0 %v365
    %v434 = vpop.f32.mrb[0].mxu0
    %v435 = vadd.f32 0.0, %v434
    %v436 = vpop.f32.mrb[0].mxu0
    %437 = vdwg.mxu0
    %v438 = vadd.f32 %v367, %v435
    %v439 = vtanh.pop %v438
    %440 = vst [vmem:[#allocation9 + $0x10] sm:$0xff] %v439
    %v441 = vld [vmem:[#allocation2 + $0x18] sm:$0xff]
    %442 = vmatprep.subr.mxu0 0.0
    %443 = vmatpush1.msra.mxu0 %v203
    %444 = vmatprep.subr.mxu0 0.0
    %445 = vmatpush1.msra.mxu0 %v204
    %446 = vmatprep.subr.mxu0 0.0
    %447 = vmatpush1.msra.mxu0 %v205
    %448 = vmatprep.subr.mxu0 0.0
    %449 = vmatpush1.msra.mxu0 %v206
    %450 = vmatprep.subr.mxu0 0.0
    %451 = vmatpush1.msra.mxu0 %v207
    %452 = vmatprep.subr.mxu0 0.0
    %453 = vmatpush1.msra.mxu0 %v208
    %454 = vmatprep.subr.mxu0 0.0
    %455 = vmatpush1.msra.mxu0 %v209
    %456 = vmatprep.subr.mxu0 0.0
    %457 = vmatpush1.msra.mxu0 %v210
    %458 = vmatprep.subr.mxu0 0.0
    %459 = vmatpush1.msra.mxu0 %v211
    %460 = vmatprep.subr.mxu0 0.0
    %461 = vmatpush1.msra.mxu0 %v212
    %462 = vmatprep.subr.mxu0 0.0
    %463 = vmatpush1.msra.mxu0 %v213
    %464 = vmatprep.subr.mxu0 0.0
    %465 = vmatpush1.msra.mxu0 %v214
    %466 = vmatprep.subr.mxu0 0.0
    %467 = vmatpush1.msra.mxu0 %v215
    %468 = vmatprep.subr.mxu0 0.0
    %469 = vmatpush1.msra.mxu0 %v216
    %470 = vmatprep.subr.mxu0 0.0
    %471 = vmatpush1.msra.mxu0 %v217
    %472 = vmatprep.subr.mxu0 0.0
    %473 = vmatpush1.msra.mxu0 %v218
    %474 = vmatprep.subr.mxu0 0.0
    %475 = vmatpush1.msra.mxu0 0.0
    %476 = vmatprep.subr.mxu0 0.0
    %477 = vmatpush1.msra.mxu0 0.0
    %478 = vmatprep.subr.mxu0 0.0
    %479 = vmatpush1.msra.mxu0 0.0
    %480 = vmatprep.subr.mxu0 0.0
    %481 = vmatpush1.msra.mxu0 0.0
    %482 = vmatprep.subr.mxu0 0.0
    %483 = vmatpush1.msra.mxu0 0.0
    %484 = vmatprep.subr.mxu0 0.0
    %485 = vmatpush1.msra.mxu0 0.0
    %486 = vmatprep.subr.mxu0 0.0
    %487 = vmatpush1.msra.mxu0 0.0
    %488 = vmatprep.subr.mxu0 0.0
    %489 = vmatpush1.msra.mxu0 0.0
    %490 = vmatprep.subr.mxu0 0.0
    %491 = vmatpush1.msra.mxu0 0.0
    %492 = vmatprep.subr.mxu0 0.0
    %493 = vmatpush1.msra.mxu0 0.0
    %494 = vmatprep.subr.mxu0 0.0
    %495 = vmatpush1.msra.mxu0 0.0
    %496 = vmatprep.subr.mxu0 0.0
    %497 = vmatpush1.msra.mxu0 0.0
    %498 = vmatprep.subr.mxu0 0.0
    %499 = vmatpush1.msra.mxu0 0.0
    %500 = vmatprep.subr.mxu0 0.0
    %501 = vmatpush1.msra.mxu0 0.0
    %502 = vmatprep.subr.mxu0 0.0
    %503 = vmatpush1.msra.mxu0 0.0
    %504 = vmatprep.subr.mxu0 0.0
    %505 = vmatpush1.msra.mxu0 0.0
    %506 = vmatprep.mubr.f32.mxu0 0.0
    %507 = vmatmul.mubr.f32.gmra.mrb[0].mxu0 %v439
    %v508 = vpop.f32.mrb[0].mxu0
    %v509 = vadd.f32 0.0, %v508
    %v510 = vpop.f32.mrb[0].mxu0
    %511 = vdwg.mxu0
    %v512 = vadd.f32 %v441, %v509
    %v513 = vtanh.pop %v512
    %514 = vst [vmem:[#allocation9 + $0x18] sm:$0xff] %v513
    %v515 = vld [vmem:[#allocation2 + $0x20] sm:$0xff]
    %516 = vmatprep.subr.mxu0 0.0
    %517 = vmatpush1.msra.mxu0 %v203
    %518 = vmatprep.subr.mxu0 0.0
    %519 = vmatpush1.msra.mxu0 %v204
    %520 = vmatprep.subr.mxu0 0.0
    %521 = vmatpush1.msra.mxu0 %v205
    %522 = vmatprep.subr.mxu0 0.0
    %523 = vmatpush1.msra.mxu0 %v206
    %524 = vmatprep.subr.mxu0 0.0
    %525 = vmatpush1.msra.mxu0 %v207
    %526 = vmatprep.subr.mxu0 0.0
    %527 = vmatpush1.msra.mxu0 %v208
    %528 = vmatprep.subr.mxu0 0.0
    %529 = vmatpush1.msra.mxu0 %v209
    %530 = vmatprep.subr.mxu0 0.0
    %531 = vmatpush1.msra.mxu0 %v210
    %532 = vmatprep.subr.mxu0 0.0
    %533 = vmatpush1.msra.mxu0 %v211
    %534 = vmatprep.subr.mxu0 0.0
    %535 = vmatpush1.msra.mxu0 %v212
    %536 = vmatprep.subr.mxu0 0.0
    %537 = vmatpush1.msra.mxu0 %v213
    %538 = vmatprep.subr.mxu0 0.0
    %539 = vmatpush1.msra.mxu0 %v214
    %540 = vmatprep.subr.mxu0 0.0
    %541 = vmatpush1.msra.mxu0 %v215
    %542 = vmatprep.subr.mxu0 0.0
    %543 = vmatpush1.msra.mxu0 %v216
    %544 = vmatprep.subr.mxu0 0.0
    %545 = vmatpush1.msra.mxu0 %v217
    %546 = vmatprep.subr.mxu0 0.0
    %547 = vmatpush1.msra.mxu0 %v218
    %548 = vmatprep.subr.mxu0 0.0
    %549 = vmatpush1.msra.mxu0 0.0
    %550 = vmatprep.subr.mxu0 0.0
    %551 = vmatpush1.msra.mxu0 0.0
    %552 = vmatprep.subr.mxu0 0.0
    %553 = vmatpush1.msra.mxu0 0.0
    %554 = vmatprep.subr.mxu0 0.0
    %555 = vmatpush1.msra.mxu0 0.0
    %556 = vmatprep.subr.mxu0 0.0
    %557 = vmatpush1.msra.mxu0 0.0
    %558 = vmatprep.subr.mxu0 0.0
    %559 = vmatpush1.msra.mxu0 0.0
    %560 = vmatprep.subr.mxu0 0.0
    %561 = vmatpush1.msra.mxu0 0.0
    %562 = vmatprep.subr.mxu0 0.0
    %563 = vmatpush1.msra.mxu0 0.0
    %564 = vmatprep.subr.mxu0 0.0
    %565 = vmatpush1.msra.mxu0 0.0
    %566 = vmatprep.subr.mxu0 0.0
    %567 = vmatpush1.msra.mxu0 0.0
    %568 = vmatprep.subr.mxu0 0.0
    %569 = vmatpush1.msra.mxu0 0.0
    %570 = vmatprep.subr.mxu0 0.0
    %571 = vmatpush1.msra.mxu0 0.0
    %572 = vmatprep.subr.mxu0 0.0
    %573 = vmatpush1.msra.mxu0 0.0
    %574 = vmatprep.subr.mxu0 0.0
    %575 = vmatpush1.msra.mxu0 0.0
    %576 = vmatprep.subr.mxu0 0.0
    %577 = vmatpush1.msra.mxu0 0.0
    %578 = vmatprep.subr.mxu0 0.0
    %579 = vmatpush1.msra.mxu0 0.0
    %580 = vmatprep.mubr.f32.mxu0 0.0
    %581 = vmatmul.mubr.f32.gmra.mrb[0].mxu0 %v513
    %v582 = vpop.f32.mrb[0].mxu0
    %v583 = vadd.f32 0.0, %v582
    %v584 = vpop.f32.mrb[0].mxu0
    %585 = vdwg.mxu0
    %v586 = vadd.f32 %v515, %v583
    %v587 = vtanh.pop %v586
    %588 = vst [vmem:[#allocation9 + $0x20] sm:$0xff] %v587
    %v589 = vld [vmem:[#allocation2 + $0x28] sm:$0xff]
    %590 = vmatprep.subr.mxu0 0.0
    %591 = vmatpush1.msra.mxu0 %v203
    %592 = vmatprep.subr.mxu0 0.0
    %593 = vmatpush1.msra.mxu0 %v204
    %594 = vmatprep.subr.mxu0 0.0
    %595 = vmatpush1.msra.mxu0 %v205
    %596 = vmatprep.subr.mxu0 0.0
    %597 = vmatpush1.msra.mxu0 %v206
    %598 = vmatprep.subr.mxu0 0.0
    %599 = vmatpush1.msra.mxu0 %v207
    %600 = vmatprep.subr.mxu0 0.0
    %601 = vmatpush1.msra.mxu0 %v208
    %602 = vmatprep.subr.mxu0 0.0
    %603 = vmatpush1.msra.mxu0 %v209
    %604 = vmatprep.subr.mxu0 0.0
    %605 = vmatpush1.msra.mxu0 %v210
    %606 = vmatprep.subr.mxu0 0.0
    %607 = vmatpush1.msra.mxu0 %v211
    %608 = vmatprep.subr.mxu0 0.0
    %609 = vmatpush1.msra.mxu0 %v212
    %610 = vmatprep.subr.mxu0 0.0
    %611 = vmatpush1.msra.mxu0 %v213
    %612 = vmatprep.subr.mxu0 0.0
    %613 = vmatpush1.msra.mxu0 %v214
    %614 = vmatprep.subr.mxu0 0.0
    %615 = vmatpush1.msra.mxu0 %v215
    %616 = vmatprep.subr.mxu0 0.0
    %617 = vmatpush1.msra.mxu0 %v216
    %618 = vmatprep.subr.mxu0 0.0
    %619 = vmatpush1.msra.mxu0 %v217
    %620 = vmatprep.subr.mxu0 0.0
    %621 = vmatpush1.msra.mxu0 %v218
    %622 = vmatprep.subr.mxu0 0.0
    %623 = vmatpush1.msra.mxu0 0.0
    %624 = vmatprep.subr.mxu0 0.0
    %625 = vmatpush1.msra.mxu0 0.0
    %626 = vmatprep.subr.mxu0 0.0
    %627 = vmatpush1.msra.mxu0 0.0
    %628 = vmatprep.subr.mxu0 0.0
    %629 = vmatpush1.msra.mxu0 0.0
    %630 = vmatprep.subr.mxu0 0.0
    %631 = vmatpush1.msra.mxu0 0.0
    %632 = vmatprep.subr.mxu0 0.0
    %633 = vmatpush1.msra.mxu0 0.0
    %634 = vmatprep.subr.mxu0 0.0
    %635 = vmatpush1.msra.mxu0 0.0
    %636 = vmatprep.subr.mxu0 0.0
    %637 = vmatpush1.msra.mxu0 0.0
    %638 = vmatprep.subr.mxu0 0.0
    %639 = vmatpush1.msra.mxu0 0.0
    %640 = vmatprep.subr.mxu0 0.0
    %641 = vmatpush1.msra.mxu0 0.0
    %642 = vmatprep.subr.mxu0 0.0
    %643 = vmatpush1.msra.mxu0 0.0
    %644 = vmatprep.subr.mxu0 0.0
    %645 = vmatpush1.msra.mxu0 0.0
    %646 = vmatprep.subr.mxu0 0.0
    %647 = vmatpush1.msra.mxu0 0.0
    %648 = vmatprep.subr.mxu0 0.0
    %649 = vmatpush1.msra.mxu0 0.0
    %650 = vmatprep.subr.mxu0 0.0
    %651 = vmatpush1.msra.mxu0 0.0
    %652 = vmatprep.subr.mxu0 0.0
    %653 = vmatpush1.msra.mxu0 0.0
    %654 = vmatprep.mubr.f32.mxu0 0.0
    %655 = vmatmul.mubr.f32.gmra.mrb[0].mxu0 %v587
    %v656 = vpop.f32.mrb[0].mxu0
    %v657 = vadd.f32 0.0, %v656
    %v658 = vpop.f32.mrb[0].mxu0
    %659 = vdwg.mxu0
    %v660 = vadd.f32 %v589, %v657
    %v661 = vtanh.pop %v660
    %662 = vst [vmem:[#allocation9 + $0x28] sm:$0xff] %v661
    %v663 = vld [vmem:[#allocation2 + $0x30] sm:$0xff]
    %664 = vmatprep.subr.mxu0 0.0
    %665 = vmatpush1.msra.mxu0 %v203
    %666 = vmatprep.subr.mxu0 0.0
    %667 = vmatpush1.msra.mxu0 %v204
    %668 = vmatprep.subr.mxu0 0.0
    %669 = vmatpush1.msra.mxu0 %v205
    %670 = vmatprep.subr.mxu0 0.0
    %671 = vmatpush1.msra.mxu0 %v206
    %672 = vmatprep.subr.mxu0 0.0
    %673 = vmatpush1.msra.mxu0 %v207
    %674 = vmatprep.subr.mxu0 0.0
    %675 = vmatpush1.msra.mxu0 %v208
    %676 = vmatprep.subr.mxu0 0.0
    %677 = vmatpush1.msra.mxu0 %v209
    %678 = vmatprep.subr.mxu0 0.0
    %679 = vmatpush1.msra.mxu0 %v210
    %680 = vmatprep.subr.mxu0 0.0
    %681 = vmatpush1.msra.mxu0 %v211
    %682 = vmatprep.subr.mxu0 0.0
    %683 = vmatpush1.msra.mxu0 %v212
    %684 = vmatprep.subr.mxu0 0.0
    %685 = vmatpush1.msra.mxu0 %v213
    %686 = vmatprep.subr.mxu0 0.0
    %687 = vmatpush1.msra.mxu0 %v214
    %688 = vmatprep.subr.mxu0 0.0
    %689 = vmatpush1.msra.mxu0 %v215
    %690 = vmatprep.subr.mxu0 0.0
    %691 = vmatpush1.msra.mxu0 %v216
    %692 = vmatprep.subr.mxu0 0.0
    %693 = vmatpush1.msra.mxu0 %v217
    %694 = vmatprep.subr.mxu0 0.0
    %695 = vmatpush1.msra.mxu0 %v218
    %696 = vmatprep.subr.mxu0 0.0
    %697 = vmatpush1.msra.mxu0 0.0
    %698 = vmatprep.subr.mxu0 0.0
    %699 = vmatpush1.msra.mxu0 0.0
    %700 = vmatprep.subr.mxu0 0.0
    %701 = vmatpush1.msra.mxu0 0.0
    %702 = vmatprep.subr.mxu0 0.0
    %703 = vmatpush1.msra.mxu0 0.0
    %704 = vmatprep.subr.mxu0 0.0
    %705 = vmatpush1.msra.mxu0 0.0
    %706 = vmatprep.subr.mxu0 0.0
    %707 = vmatpush1.msra.mxu0 0.0
    %708 = vmatprep.subr.mxu0 0.0
    %709 = vmatpush1.msra.mxu0 0.0
    %710 = vmatprep.subr.mxu0 0.0
    %711 = vmatpush1.msra.mxu0 0.0
    %712 = vmatprep.subr.mxu0 0.0
    %713 = vmatpush1.msra.mxu0 0.0
    %714 = vmatprep.subr.mxu0 0.0
    %715 = vmatpush1.msra.mxu0 0.0
    %716 = vmatprep.subr.mxu0 0.0
    %717 = vmatpush1.msra.mxu0 0.0
    %718 = vmatprep.subr.mxu0 0.0
    %719 = vmatpush1.msra.mxu0 0.0
    %720 = vmatprep.subr.mxu0 0.0
    %721 = vmatpush1.msra.mxu0 0.0
    %722 = vmatprep.subr.mxu0 0.0
    %723 = vmatpush1.msra.mxu0 0.0
    %724 = vmatprep.subr.mxu0 0.0
    %725 = vmatpush1.msra.mxu0 0.0
    %726 = vmatprep.subr.mxu0 0.0
    %727 = vmatpush1.msra.mxu0 0.0
    %728 = vmatprep.mubr.f32.mxu0 0.0
    %729 = vmatmul.mubr.f32.gmra.mrb[0].mxu0 %v661
    %v730 = vpop.f32.mrb[0].mxu0
    %v731 = vadd.f32 0.0, %v730
    %v732 = vpop.f32.mrb[0].mxu0
    %733 = vdwg.mxu0
    %v734 = vadd.f32 %v663, %v731
    %v735 = vtanh.pop %v734
    %736 = vst [vmem:[#allocation9 + $0x30] sm:$0xff] %v735
    %v737 = vld [vmem:[#allocation2 + $0x38] sm:$0xff]
    %738 = vmatprep.subr.mxu0 0.0
    %739 = vmatpush1.msra.mxu0 %v203
    %740 = vmatprep.subr.mxu0 0.0
    %741 = vmatpush1.msra.mxu0 %v204
    %742 = vmatprep.subr.mxu0 0.0
    %743 = vmatpush1.msra.mxu0 %v205
    %744 = vmatprep.subr.mxu0 0.0
    %745 = vmatpush1.msra.mxu0 %v206
    %746 = vmatprep.subr.mxu0 0.0
    %747 = vmatpush1.msra.mxu0 %v207
    %748 = vmatprep.subr.mxu0 0.0
    %749 = vmatpush1.msra.mxu0 %v208
    %750 = vmatprep.subr.mxu0 0.0
    %751 = vmatpush1.msra.mxu0 %v209
    %752 = vmatprep.subr.mxu0 0.0
    %753 = vmatpush1.msra.mxu0 %v210
    %754 = vmatprep.subr.mxu0 0.0
    %755 = vmatpush1.msra.mxu0 %v211
    %756 = vmatprep.subr.mxu0 0.0
    %757 = vmatpush1.msra.mxu0 %v212
    %758 = vmatprep.subr.mxu0 0.0
    %759 = vmatpush1.msra.mxu0 %v213
    %760 = vmatprep.subr.mxu0 0.0
    %761 = vmatpush1.msra.mxu0 %v214
    %762 = vmatprep.subr.mxu0 0.0
    %763 = vmatpush1.msra.mxu0 %v215
    %764 = vmatprep.subr.mxu0 0.0
    %765 = vmatpush1.msra.mxu0 %v216
    %766 = vmatprep.subr.mxu0 0.0
    %767 = vmatpush1.msra.mxu0 %v217
    %768 = vmatprep.subr.mxu0 0.0
    %769 = vmatpush1.msra.mxu0 %v218
    %770 = vmatprep.subr.mxu0 0.0
    %771 = vmatpush1.msra.mxu0 0.0
    %772 = vmatprep.subr.mxu0 0.0
    %773 = vmatpush1.msra.mxu0 0.0
    %774 = vmatprep.subr.mxu0 0.0
    %775 = vmatpush1.msra.mxu0 0.0
    %776 = vmatprep.subr.mxu0 0.0
    %777 = vmatpush1.msra.mxu0 0.0
    %778 = vmatprep.subr.mxu0 0.0
    %779 = vmatpush1.msra.mxu0 0.0
    %780 = vmatprep.subr.mxu0 0.0
    %781 = vmatpush1.msra.mxu0 0.0
    %782 = vmatprep.subr.mxu0 0.0
    %783 = vmatpush1.msra.mxu0 0.0
    %784 = vmatprep.subr.mxu0 0.0
    %785 = vmatpush1.msra.mxu0 0.0
    %786 = vmatprep.subr.mxu0 0.0
    %787 = vmatpush1.msra.mxu0 0.0
    %788 = vmatprep.subr.mxu0 0.0
    %789 = vmatpush1.msra.mxu0 0.0
    %790 = vmatprep.subr.mxu0 0.0
    %791 = vmatpush1.msra.mxu0 0.0
    %792 = vmatprep.subr.mxu0 0.0
    %793 = vmatpush1.msra.mxu0 0.0
    %794 = vmatprep.subr.mxu0 0.0
    %795 = vmatpush1.msra.mxu0 0.0
    %796 = vmatprep.subr.mxu0 0.0
    %797 = vmatpush1.msra.mxu0 0.0
    %798 = vmatprep.subr.mxu0 0.0
    %799 = vmatpush1.msra.mxu0 0.0
    %800 = vmatprep.subr.mxu0 0.0
    %801 = vmatpush1.msra.mxu0 0.0
    %802 = vmatprep.mubr.f32.mxu0 0.0
    %803 = vmatmul.mubr.f32.gmra.mrb[0].mxu0 %v735
    %v804 = vpop.f32.mrb[0].mxu0
    %v805 = vadd.f32 0.0, %v804
    %v806 = vpop.f32.mrb[0].mxu0
    %807 = vdwg.mxu0
    %v808 = vadd.f32 %v737, %v805
    %v809 = vtanh.pop %v808
    %810 = vst [vmem:[#allocation9 + $0x38] sm:$0xff] %v809
    // Predicated region
    $region30: #{tpu_custom_call.1} parent=1 // pred_check
      _
    $region31: #{tpu_custom_call.1} parent=1 // pred_check_branch
      %812 = sbr.rel (0) target = $region33
    $region32: #{tpu_custom_call.1} parent=1 // pred_region
      %s814 = ssub.s32 1024, 1024
      %815 = vsyncadd [#allocation5], %s814
      %s816 = sshll.u32 [#allocation9], 4
      %s817 = int_to_ptr.vmem [resolvable:$true] %s816
      %822 = dma.vmem_to_hbm [thread:$0]  %s817, 1024, %s4, [#allocation5], 128, 128, 8
    $region33: #{tpu_custom_call.1} parent=1 // pred_fallthru
      _
    // Predicated region
    $region34: #{tpu_custom_call.1} parent=1 // pred_check
      _
    $region35: #{tpu_custom_call.1} parent=1 // pred_check_branch
      %824 = sbr.rel (0) target = $region37
    $region36: #{tpu_custom_call.1} parent=1 // pred_region
      %825 = dma.done [#allocation5], 1024
    $region37: #{tpu_custom_call.1} parent=1 // pred_fallthru
      _
    %826 = vsyncpa [#allocation4], 1
    %827 = vsyncpa [#allocation7], 1
    %828 = vsyncpa [#allocation5], 1

</llo_original>
